<compile_context>
chip_gen: v6e
topology: v6e:2x2x1
jax: 0.10.0
libtpu: 0.0.40
codegen_flags: <defaults>
</compile_context>

<pallas_src>
import functools

import jax
import jax.numpy as jnp
from jax.experimental import pallas as pl
from jax.experimental.pallas import tpu as pltpu

_SQRT_2_OVER_PI = 0.7978845608028654


def _gelu_tanh(x):
    # gelu_pytorch_tanh: 0.5*x*(1+tanh(sqrt(2/pi)*(x+0.044715*x^3)))
    return 0.5 * x * (1.0 + jnp.tanh(_SQRT_2_OVER_PI * (x + 0.044715 * x * x * x)))


def _mlp_kernel(x_ref, w_fc_ref, b_fc_ref, w_proj_ref, b_proj_ref, o_ref,
                acc_ref=None, *, n_j, gelu_dtype, add_output_bias):
    # x_ref:      (tm, H)
    # w_fc_ref:   (H, ti)     b_fc_ref:   (1, ti)
    # w_proj_ref: (ti, H)     b_proj_ref: (1, H)
    # o_ref:      (tm, H)     acc_ref:    (tm, H) f32 scratch (only when n_j > 1)
    j = pl.program_id(2)

    x = x_ref[...]

    # c_fc slice: hidden -> ti intermediate columns (MXU, f32 accumulate).
    h = jnp.dot(x, w_fc_ref[...], preferred_element_type=jnp.float32)
    # bias-add + gelu in bf16 on chips with a bf16 VPU/EUP (v6e/v7x), f32 otherwise.
    h = _gelu_tanh(h.astype(gelu_dtype) + b_fc_ref[...].astype(gelu_dtype))

    # c_proj slice: ti intermediate rows -> hidden (f32 partial).
    partial = jnp.dot(h.astype(x.dtype), w_proj_ref[...],
                      preferred_element_type=jnp.float32)

    if add_output_bias:
        bias = b_proj_ref[...].astype(jnp.float32)
    else:
        bias = 0.0  # b_proj is added exactly once in the wrapper epilogue (I-split path).

    # TODO(synk): training-mode dropout would need pltpu.prng_seed + prng_random_bits.
    if n_j == 1:
        # Single j step (weights-resident / per-split-resident): no accumulator traffic.
        o_ref[...] = (partial + bias).astype(o_ref.dtype)
    else:
        @pl.when(j == 0)
        def _init():
            acc_ref[...] = partial                      # overwrite: no zero-init RMW

        @pl.when(jnp.logical_and(j > 0, j < n_j - 1))
        def _accumulate():
            acc_ref[...] += partial

        @pl.when(j == n_j - 1)
        def _finalize():
            # Last partial folded directly into the epilogue: saves one full
            # (tm, H) f32 accumulator write+read per token tile.
            o_ref[...] = (acc_ref[...] + partial + bias).astype(o_ref.dtype)


def _round_up(x, m):
    return ((x + m - 1) // m) * m


def _vmem_capacity_bytes():
    """Physical per-core VMEM (generation-aware), with safe fallbacks."""
    try:
        cap = int(pltpu.get_tpu_info().vmem_capacity_bytes)
        if cap > 0:
            return cap
    except Exception:
        pass
    try:
        kind = jax.devices()[0].device_kind.lower()
    except Exception:
        kind = ""
    if "v7" in kind:
        return 64 * 1024 * 1024
    return 128 * 1024 * 1024


def _has_bf16_vpu():
    """v6e/v7x have bf16 VPU/EUP; v5e and older do not."""
    try:
        kind = jax.devices()[0].device_kind.lower()
    except Exception:
        return False
    return not any(tag in kind for tag in ("v2", "v3", "v4", "v5"))


def _pick_ti(I, H, itemsize, budget, block_i):
    """Intermediate-dim tile.

    Prefer ti == I (weights VMEM-resident, DMA'd once, single j step) when the
    full double-buffered weights fit ~half the budget; otherwise the largest
    128-multiple divisor of I whose streamed (H,ti)/(ti,H) double-buffered
    slabs fit ~45% of the budget (keeps >=512 B contiguous per DMA'd row).
    """
    ti_cap = I if block_i is None else min(I, max(block_i, min(I, 128)))
    if ti_cap >= I and 4 * H * I * itemsize <= budget // 2:
        return I                                   # weights-resident fast path
    slab_budget = int(0.45 * budget)
    fallback = None
    c = (min(ti_cap, 4096) // 128) * 128
    while c >= 128:
        if I % c == 0:
            if 4 * H * c * itemsize <= slab_budget:
                return c
            fallback = c                           # ends at the smallest 128-mult divisor
        c -= 128
    if fallback is not None:
        return fallback
    # TODO(synk): ragged I (no 128-multiple divisor) keeps full-I weight slabs.
    return I


def _vmem_estimate(tm, ti, H, itemsize, gelu_itemsize, use_acc):
    est = 4 * tm * H * itemsize              # x + out tiles, double-buffered
    est += 4 * H * ti * itemsize             # W_fc + W_proj slabs, double-buffered
    est += 4 * (ti + H) * itemsize           # bias slabs, double-buffered
    est += tm * ti * (4 + gelu_itemsize)     # first-matmul f32 result + gelu intermediate
    if use_acc:
        est += tm * H * 4                    # f32 accumulator scratch
    return est


def _pick_tm(T, H, ti, itemsize, gelu_itemsize, budget, block_m, use_acc):
    """Token tile: as large as the VMEM budget allows (raises weight-streaming
    arithmetic intensity ~ tm flops/byte), capped by T and the user override."""
    sublane = 8 if itemsize >= 4 else 32 // itemsize
    t_cap = _round_up(T, sublane)
    if block_m is not None:
        cap = max(sublane, _round_up(min(block_m, t_cap), sublane))
    else:
        cap = min(1024, t_cap)
    cands = [c for c in (1024, 896, 768, 640, 512, 384, 256, 192, 128,
                         96, 64, 48, 32, 16, 8)
             if c <= cap and c % sublane == 0]
    if not cands or cands[0] != cap:
        cands = [cap] + cands
    for tm in cands:
        if _vmem_estimate(tm, ti, H, itemsize, gelu_itemsize, use_acc) <= budget:
            return tm, sublane
    return cands[-1], sublane


@functools.partial(jax.jit, static_argnames=("block_m", "block_i"))
def gpt_bigcode_mlp(x, w_fc, b_fc, w_proj, b_proj, *, block_m=None, block_i=None):
    """GPTBigCodeMLP forward: gelu_tanh(x @ w_fc + b_fc) @ w_proj + b_proj.

    x: [T, H]; w_fc: [H, I]; b_fc: [I]; w_proj: [I, H]; b_proj: [H].
    (Weights stored pre-transposed as [in_features, out_features].)
    Dropout (resid_pdrop) is identity at inference.
    """
    T, H = x.shape
    I = w_fc.shape[1]
    itemsize = jnp.dtype(x.dtype).itemsize

    # Generation-aware VMEM budgeting (v7x: 64 MiB/core, v5e/v6e: 128 MiB).
    vmem_cap = _vmem_capacity_bytes()
    budget = int(0.70 * vmem_cap)            # planning budget for the tile selection
    vmem_limit = int(0.85 * vmem_cap)        # scoped-VMEM limit handed to Mosaic

    gelu_dtype = (x.dtype if (x.dtype == jnp.bfloat16 and _has_bf16_vpu())
                  else jnp.float32)
    gelu_itemsize = jnp.dtype(gelu_dtype).itemsize

    # ---- tile selection ----
    ti = _pick_ti(I, H, itemsize, budget, block_i)
    n_j_total = I // ti
    tm, sublane = _pick_tm(T, H, ti, itemsize, gelu_itemsize, budget, block_m,
                           use_acc=n_j_total > 1)

    # Rebalance tm to minimize padding waste for ragged T.
    n_tiles = pl.cdiv(T, tm)
    tm = _round_up(pl.cdiv(T, n_tiles), sublane)
    T_pad = tm * n_tiles

    # Decode / small-T: split the I axis along a leading "parallel" grid axis so
    # v7x's two TensorCores stream disjoint weight halves (harmless elsewhere).
    n_split = 2 if (n_tiles == 1 and n_j_total >= 2 and n_j_total % 2 == 0) else 1
    n_j = n_j_total // n_split
    use_acc = n_j > 1
    add_output_bias = (n_split == 1)

    x_p = x if T_pad == T else jnp.pad(x, ((0, T_pad - T), (0, 0)))
    b_fc2 = b_fc.reshape(1, I)
    b_proj2 = b_proj.reshape(1, H)

    grid = (n_split, n_tiles, n_j)

    kernel = functools.partial(_mlp_kernel, n_j=n_j, gelu_dtype=gelu_dtype,
                               add_output_bias=add_output_bias)

    def _col(s, j):  # block column along the I axis for this grid step
        return s * n_j + j

    in_specs = [
        pl.BlockSpec((tm, H), lambda s, i, j: (i, 0)),              # x tile (resident over s, j)
        pl.BlockSpec((H, ti), lambda s, i, j: (0, _col(s, j))),     # W_fc slab (streamed over j)
        pl.BlockSpec((1, ti), lambda s, i, j: (0, _col(s, j))),     # b_fc slab
        pl.BlockSpec((ti, H), lambda s, i, j: (_col(s, j), 0)),     # W_proj slab (streamed over j)
        pl.BlockSpec((1, H), lambda s, i, j: (0, 0)),               # b_proj (resident)
    ]
    out_spec = pl.BlockSpec((None, tm, H), lambda s, i, j: (s, i, 0))

    scratch_shapes = [pltpu.VMEM((tm, H), jnp.float32)] if use_acc else []

    resident_weights = (n_split == 1 and ti == I)
    weight_passes = 1 if resident_weights else n_tiles
    cost = pl.CostEstimate(
        flops=4 * T_pad * H * I,                       # two matmuls: 2*T*H*I each
        transcendentals=T_pad * I,                     # one tanh per intermediate element
        bytes_accessed=int(T_pad * H * itemsize                    # x read
                           + n_split * T_pad * H * itemsize        # out write(s)
                           + weight_passes * 2 * H * I * itemsize  # weight (re)reads
                           + (I + H) * itemsize),                  # biases
    )

    out = pl.pallas_call(
        kernel,
        out_shape=jax.ShapeDtypeStruct((n_split, T_pad, H), x.dtype),
        grid_spec=pltpu.PrefetchScalarGridSpec(
            num_scalar_prefetch=0,
            grid=grid,
            in_specs=in_specs,
            out_specs=out_spec,
            scratch_shapes=scratch_shapes,
        ),
        compiler_params=pltpu.CompilerParams(
            dimension_semantics=("parallel", "parallel", "arbitrary"),
            vmem_limit_bytes=vmem_limit,
        ),
        cost_estimate=cost,
    )(x_p, w_fc, b_fc2, w_proj, b_proj2)

    if n_split == 1:
        y = out[0]
    else:
        # Tiny epilogue: sum per-split partials and add b_proj exactly once.
        y = (out.astype(jnp.float32).sum(axis=0)
             + b_proj2.astype(jnp.float32)).astype(x.dtype)
    return y[:T] if T_pad != T else y


def _reference(x, w_fc, b_fc, w_proj, b_proj):
    h = x.astype(jnp.float32) @ w_fc.astype(jnp.float32) + b_fc.astype(jnp.float32)
    h = _gelu_tanh(h)
    return h @ w_proj.astype(jnp.float32) + b_proj.astype(jnp.float32)


def _make_params(key, T, H, I, dtype):
    k_x, k_wfc, k_bfc, k_wproj, k_bproj = jax.random.split(key, 5)
    x = jax.random.normal(k_x, (T, H), dtype=jnp.float32).astype(dtype)
    w_fc = (jax.random.normal(k_wfc, (H, I), dtype=jnp.float32) * 0.02).astype(dtype)
    b_fc = (jax.random.normal(k_bfc, (I,), dtype=jnp.float32) * 0.02).astype(dtype)
    w_proj = (jax.random.normal(k_wproj, (I, H), dtype=jnp.float32) * 0.02).astype(dtype)
    b_proj = (jax.random.normal(k_bproj, (H,), dtype=jnp.float32) * 0.02).astype(dtype)
    return x, w_fc, b_fc, w_proj, b_proj


if __name__ == "__main__":
    key = jax.random.PRNGKey(0)
    k1, k2, k3, k4 = jax.random.split(key, 4)

    # 1) Tiny f32 case: weights-resident fast path (single grid step, no accumulator).
    T, H = 8, 32
    I = 4 * H
    x, w_fc, b_fc, w_proj, b_proj = _make_params(k1, T, H, I, jnp.float32)
    out = jax.block_until_ready(gpt_bigcode_mlp(x, w_fc, b_fc, w_proj, b_proj))
    ref = _reference(x, w_fc, b_fc, w_proj, b_proj)
    assert out.shape == (T, H)
    assert jnp.allclose(out, ref, atol=1e-5, rtol=1e-5), "f32 mismatch vs reference"

    # 2) Multi-block grid (token tiles + I-axis accumulation over 2 steps) with a
    #    non-tile-multiple token count to exercise the padding path.
    T, H = 44, 32
    I = 256
    x, w_fc, b_fc, w_proj, b_proj = _make_params(k2, T, H, I, jnp.float32)
    out = jax.block_until_ready(
        gpt_bigcode_mlp(x, w_fc, b_fc, w_proj, b_proj, block_m=16, block_i=128))
    ref = _reference(x, w_fc, b_fc, w_proj, b_proj)
    assert out.shape == (T, H)
    assert jnp.allclose(out, ref, atol=1e-5, rtol=1e-5), "tiled f32 mismatch vs reference"

    # 3) bf16 path (production dtype), loose tolerance vs f32 reference of bf16 inputs.
    T, H = 48, 32
    I = 4 * H
    x, w_fc, b_fc, w_proj, b_proj = _make_params(k3, T, H, I, jnp.bfloat16)
    out = jax.block_until_ready(
        gpt_bigcode_mlp(x, w_fc, b_fc, w_proj, b_proj, block_m=16, block_i=128))
    ref = _reference(x, w_fc, b_fc, w_proj, b_proj)
    assert out.shape == (T, H)
    assert jnp.allclose(out.astype(jnp.float32), ref, atol=5e-2, rtol=5e-2), \
        "bf16 mismatch vs reference"

    # 4) Decode-like case: single token tile, I axis split across the leading
    #    "parallel" grid axis (partials summed + bias added in the epilogue).
    T, H = 8, 32
    I = 512
    x, w_fc, b_fc, w_proj, b_proj = _make_params(k4, T, H, I, jnp.float32)
    out = jax.block_until_ready(
        gpt_bigcode_mlp(x, w_fc, b_fc, w_proj, b_proj, block_i=128))
    ref = _reference(x, w_fc, b_fc, w_proj, b_proj)
    assert out.shape == (T, H)
    assert jnp.allclose(out, ref, atol=1e-5, rtol=1e-5), "split-I f32 mismatch vs reference"

    print("KERNEL_OK")
</pallas_src>

<mosaic_0001>
module attributes {stable_mosaic.version = 11 : i64} {
  func.func @_mlp_kernel(%arg0: i32, %arg1: i32, %arg2: i32, %arg3: memref<8x32xf32, #tpu.memory_space<vmem>>, %arg4: memref<32x128xf32, #tpu.memory_space<vmem>>, %arg5: memref<1x128xf32, #tpu.memory_space<vmem>>, %arg6: memref<128x32xf32, #tpu.memory_space<vmem>>, %arg7: memref<1x32xf32, #tpu.memory_space<vmem>>, %arg8: memref<1x8x32xf32, #tpu.memory_space<vmem>>) attributes {dimension_semantics = [#tpu.dimension_semantics<parallel>, #tpu.dimension_semantics<parallel>, #tpu.dimension_semantics<arbitrary>], iteration_bounds = array<i64: 1, 1, 1>, scalar_prefetch = 0 : i64, scratch_operands = 0 : i64, tpu.core_type = #tpu.core_type<tc>, window_params = [{transform_indices = @transform_0, window_bounds = array<i64: 8, 32>}, {transform_indices = @transform_1, window_bounds = array<i64: 32, 128>}, {transform_indices = @transform_2, window_bounds = array<i64: 1, 128>}, {transform_indices = @transform_3, window_bounds = array<i64: 128, 32>}, {pipeline_mode = #tpu.pipeline_mode<synchronous>, transform_indices = @transform_4, window_bounds = array<i64: 1, 32>}, {transform_indices = @transform_5, window_bounds = array<i64: 1, 8, 32>}]} {
    %c0 = arith.constant 0 : index
    %c0_0 = arith.constant 0 : index
    %0 = vector.load %arg3[%c0, %c0_0] : memref<8x32xf32, #tpu.memory_space<vmem>>, vector<8x32xf32>
    %c0_1 = arith.constant 0 : index
    %c0_2 = arith.constant 0 : index
    %1 = vector.load %arg4[%c0_1, %c0_2] : memref<32x128xf32, #tpu.memory_space<vmem>>, vector<32x128xf32>
    %cst = arith.constant dense<0.000000e+00> : vector<8x128xf32>
    %2 = tpu.matmul %0, %1, %cst {dimension_numbers = #tpu.dot_dimension_numbers<[1], [0], [0], [1], [0, 0, 1, 1], [], []>} : vector<8x32xf32>, vector<32x128xf32>, vector<8x128xf32> -> vector<8x128xf32>
    %c0_3 = arith.constant 0 : index
    %c0_4 = arith.constant 0 : index
    %3 = vector.load %arg5[%c0_3, %c0_4] : memref<1x128xf32, #tpu.memory_space<vmem>>, vector<1x128xf32>
    %4 = vector.broadcast %3 : vector<1x128xf32> to vector<8x128xf32>
    %5 = arith.addf %2, %4 : vector<8x128xf32>
    %cst_5 = arith.constant 5.000000e-01 : f32
    %6 = vector.broadcast %cst_5 : f32 to vector<8x128xf32>
    %7 = arith.mulf %6, %5 : vector<8x128xf32>
    %cst_6 = arith.constant 4.471500e-02 : f32
    %8 = vector.broadcast %cst_6 : f32 to vector<8x128xf32>
    %9 = arith.mulf %8, %5 : vector<8x128xf32>
    %10 = arith.mulf %9, %5 : vector<8x128xf32>
    %11 = arith.mulf %10, %5 : vector<8x128xf32>
    %12 = arith.addf %5, %11 : vector<8x128xf32>
    %cst_7 = arith.constant 0.797884583 : f32
    %13 = vector.broadcast %cst_7 : f32 to vector<8x128xf32>
    %14 = arith.mulf %13, %12 : vector<8x128xf32>
    %15 = math.tanh %14 : vector<8x128xf32>
    %cst_8 = arith.constant 1.000000e+00 : f32
    %16 = vector.broadcast %cst_8 : f32 to vector<8x128xf32>
    %17 = arith.addf %16, %15 : vector<8x128xf32>
    %18 = arith.mulf %7, %17 : vector<8x128xf32>
    %c0_9 = arith.constant 0 : index
    %c0_10 = arith.constant 0 : index
    %19 = vector.load %arg6[%c0_9, %c0_10] : memref<128x32xf32, #tpu.memory_space<vmem>>, vector<128x32xf32>
    %cst_11 = arith.constant dense<0.000000e+00> : vector<8x32xf32>
    %20 = tpu.matmul %18, %19, %cst_11 {dimension_numbers = #tpu.dot_dimension_numbers<[1], [0], [0], [1], [0, 0, 1, 1], [], []>} : vector<8x128xf32>, vector<128x32xf32>, vector<8x32xf32> -> vector<8x32xf32>
    %c0_12 = arith.constant 0 : index
    %c0_13 = arith.constant 0 : index
    %21 = vector.load %arg7[%c0_12, %c0_13] : memref<1x32xf32, #tpu.memory_space<vmem>>, vector<1x32xf32>
    %22 = vector.broadcast %21 : vector<1x32xf32> to vector<8x32xf32>
    %23 = arith.addf %20, %22 : vector<8x32xf32>
    %c0_14 = arith.constant 0 : index
    %c0_15 = arith.constant 0 : index
    %c0_16 = arith.constant 0 : index
    %24 = vector.load %arg8[%c0_14, %c0_15, %c0_16] : memref<1x8x32xf32, #tpu.memory_space<vmem>>, vector<1x8x32xf32>
    %25 = vector.shape_cast %24 : vector<1x8x32xf32> to vector<8x32xf32>
    %26 = vector.shape_cast %23 : vector<8x32xf32> to vector<1x8x32xf32>
    tpu.vector_store %arg8[%c0_14, %c0_15, %c0_16], %26 {strides = array<i32>} : memref<1x8x32xf32, #tpu.memory_space<vmem>>, vector<1x8x32xf32>,
    return
  }
  func.func @transform_0(%arg0: i32, %arg1: i32, %arg2: i32) -> (i32, i32) {
    %c0_i32 = arith.constant 0 : i32
    %c0_i32_0 = arith.constant 0 : i32
    return %arg1, %c0_i32 : i32, i32
  }
  func.func @transform_1(%arg0: i32, %arg1: i32, %arg2: i32) -> (i32, i32) {
    %c1_i32 = arith.constant 1 : i32
    %0 = arith.muli %arg0, %c1_i32 : i32
    %1 = arith.addi %0, %arg2 : i32
    %c0_i32 = arith.constant 0 : i32
    %c0_i32_0 = arith.constant 0 : i32
    return %c0_i32, %1 : i32, i32
  }
  func.func @transform_2(%arg0: i32, %arg1: i32, %arg2: i32) -> (i32, i32) {
    %c1_i32 = arith.constant 1 : i32
    %0 = arith.muli %arg0, %c1_i32 : i32
    %1 = arith.addi %0, %arg2 : i32
    %c0_i32 = arith.constant 0 : i32
    %c0_i32_0 = arith.constant 0 : i32
    return %c0_i32, %1 : i32, i32
  }
  func.func @transform_3(%arg0: i32, %arg1: i32, %arg2: i32) -> (i32, i32) {
    %c1_i32 = arith.constant 1 : i32
    %0 = arith.muli %arg0, %c1_i32 : i32
    %1 = arith.addi %0, %arg2 : i32
    %c0_i32 = arith.constant 0 : i32
    %c0_i32_0 = arith.constant 0 : i32
    return %1, %c0_i32 : i32, i32
  }
  func.func @transform_4(%arg0: i32, %arg1: i32, %arg2: i32) -> (i32, i32) {
    %c0_i32 = arith.constant 0 : i32
    %c0_i32_0 = arith.constant 0 : i32
    %c0_i32_1 = arith.constant 0 : i32
    return %c0_i32, %c0_i32_0 : i32, i32
  }
  func.func @transform_5(%arg0: i32, %arg1: i32, %arg2: i32) -> (i32, i32, i32) {
    %c0_i32 = arith.constant 0 : i32
    %c0_i32_0 = arith.constant 0 : i32
    return %arg0, %arg1, %c0_i32 : i32, i32, i32
  }
}

</mosaic_0001>

<llo_original>
// kernel: gpt_bigcode_mlp.1
$region0: #{gpt_bigcode_mlp.1}
  #allocation0 [shape = 'u32[]', space=smem, size = 0x4, offset = 0x4, fixed_abs, tag = 'smem constant byte address 0x4 - core index']
  #allocation1 [shape = 'u32[144,128]{1,0:T(1,128)}', space=vmem, size = 0x12000, scoped, tag = 'internal scratch']
  %s0 = inlined_call_operand.vmem [shape: f32[8,32], index: 0, kind: input, shape index: {}]
  %s1 = inlined_call_operand.vmem [shape: f32[32,128], index: 1, kind: input, shape index: {}]
  %s2 = inlined_call_operand.vmem [shape: f32[1,128], index: 2, kind: input, shape index: {}]
  %s3 = inlined_call_operand.vmem [shape: f32[128,32], index: 3, kind: input, shape index: {}]
  %s4 = inlined_call_operand.vmem [shape: f32[1,32], index: 4, kind: input, shape index: {}]
  %s5 = inlined_call_operand.hbm [shape: f32[1,8,32], index: 5, kind: output, shape index: {}]
  %s6 = sld [smem:[#allocation0]]
  $region30: #{gpt_bigcode_mlp.1} parent=0
    _
  %s8 = ssub.s32 1, %s6
  %s9 = scalar_select 0, %s8, %s6
  $region1: #{gpt_bigcode_mlp.1} parent=0
    #allocation2 [shape = 'u8[4096]{0}', space=vmem, size = 0x1000, scoped, tag = 'output window, operand 0, single buffered']
    #allocation3 [shape = 's32[1]{0}', space=sflag, size = 0x4, scoped, tag = 'scoped memory for gpt_bigcode_mlp.1']
    %10 = vsyncpa [#allocation3], 0
    // Predicated region
    $region2: #{gpt_bigcode_mlp.1} parent=1 // pred_check
      _
    $region3: #{gpt_bigcode_mlp.1} parent=1 // pred_check_branch
      %12 = sbr.rel (0) target = $region5
    $region4: #{gpt_bigcode_mlp.1} parent=1 // pred_region
      _
    $region5: #{gpt_bigcode_mlp.1} parent=1 // pred_fallthru
      _
    // Predicated region
    $region6: #{gpt_bigcode_mlp.1} parent=1 // pred_check
      _
    $region7: #{gpt_bigcode_mlp.1} parent=1 // pred_check_branch
      %14 = sbr.rel (0) target = $region9
    $region8: #{gpt_bigcode_mlp.1} parent=1 // pred_region
      %s15 = sadd.s32 0, 0
      %p16 = scmp.lt.s32.totalorder %s15, 0
      %s17 = scalar_select %p16, %s15, 0
      %s18 = smul.addr %s17, 8
      %s19 = scalar_lea.vmem %s1, %s18
      %s20 = sadd.s32 0, 0
    $region9: #{gpt_bigcode_mlp.1} parent=1 // pred_fallthru
      _
    // Predicated region
    $region10: #{gpt_bigcode_mlp.1} parent=1 // pred_check
      _
    $region11: #{gpt_bigcode_mlp.1} parent=1 // pred_check_branch
      %22 = sbr.rel (0) target = $region13
    $region12: #{gpt_bigcode_mlp.1} parent=1 // pred_region
      %s23 = sadd.s32 0, 0
      %p24 = scmp.lt.s32.totalorder %s23, 0
      %s25 = scalar_select %p24, %s23, 0
      %s26 = scalar_lea.vmem %s2, %s25
      %s27 = sadd.s32 0, 0
    $region13: #{gpt_bigcode_mlp.1} parent=1 // pred_fallthru
      _
    // Predicated region
    $region14: #{gpt_bigcode_mlp.1} parent=1 // pred_check
      _
    $region15: #{gpt_bigcode_mlp.1} parent=1 // pred_check_branch
      %29 = sbr.rel (0) target = $region17
    $region16: #{gpt_bigcode_mlp.1} parent=1 // pred_region
      %s30 = sadd.s32 0, 0
      %s31 = smul.u32 16, %s30
      %p32 = scmp.lt.s32.totalorder %s31, 15
      %s33 = scalar_select %p32, %s31, 15
      %s34 = smul.addr %s33, 8
      %s35 = scalar_lea.vmem %s3, %s34
      %s36 = sadd.s32 0, 0
      %s37 = smul.u32 16, %s36
    $region17: #{gpt_bigcode_mlp.1} parent=1 // pred_fallthru
      _
    // Predicated region
    $region18: #{gpt_bigcode_mlp.1} parent=1 // pred_check
      _
    $region19: #{gpt_bigcode_mlp.1} parent=1 // pred_check_branch
      %39 = sbr.rel (0) target = $region21
    $region20: #{gpt_bigcode_mlp.1} parent=1 // pred_region
      _
    $region21: #{gpt_bigcode_mlp.1} parent=1 // pred_fallthru
      _
    %s40 = sadd.s32 0, 0
    %p41 = scmp.lt.s32.totalorder %s40, 0
    %s42 = scalar_select %p41, %s40, 0
    %s43 = smul.addr %s42, 8
    %s44 = scalar_lea.vmem %s1, %s43
    %s45 = sadd.s32 0, 0
    %p46 = scmp.lt.s32.totalorder %s45, 0
    %s47 = scalar_select %p46, %s45, 0
    %s48 = scalar_lea.vmem %s2, %s47
    %s49 = sadd.s32 0, 0
    %s50 = smul.u32 16, %s49
    %p51 = scmp.lt.s32.totalorder %s50, 15
    %s52 = scalar_select %p51, %s50, 15
    %s53 = smul.addr %s52, 8
    %s54 = scalar_lea.vmem %s3, %s53
    %s55 = sadd.s32 0, 0
    %p56 = scmp.lt.s32.totalorder %s55, 0
    %s57 = scalar_select %p56, %s55, 0
    %s58 = smul.addr %s57, 8
    %s59 = scalar_lea.vmem %s1, %s58
    %s60 = sadd.s32 0, 0
    %s61 = sadd.s32 0, 0
    %p62 = scmp.lt.s32.totalorder %s61, 0
    %s63 = scalar_select %p62, %s61, 0
    %s64 = scalar_lea.vmem %s2, %s63
    %s65 = sadd.s32 0, 0
    %s66 = sadd.s32 0, 0
    %s67 = smul.u32 16, %s66
    %p68 = scmp.lt.s32.totalorder %s67, 15
    %s69 = scalar_select %p68, %s67, 15
    %s70 = smul.addr %s69, 8
    %s71 = scalar_lea.vmem %s3, %s70
    %s72 = sadd.s32 0, 0
    %s73 = smul.u32 16, %s72
    %v74 = vld [vmem:[%s0] sm:$0xff]
    %v75 = vld [vmem:[%s59] sm:$0xff]
    %v76 = vld [vmem:[%s59 + $0x8] sm:$0xff]
    %v77 = vld [vmem:[%s59 + $0x10] sm:$0xff]
    %v78 = vld [vmem:[%s59 + $0x18] sm:$0xff]
    %v79 = vld [vmem:[%s64] sm:$0x1]
    %v81 = vlaneseq
    %v82 = vshrl.u32 %v81, 7
    %v83 = vsub.s32 0, %v82
    %v84 = vrot.slane %v79, %v83
    %vm86 = vcmask 261120
    %v88 = vsel %vm86, %v74, 0
    %90 = vmatprep.subr.mxu0 0.0
    %91 = vmatpush1.msra.mxu0 0.0
    %92 = vmatprep.subr.mxu0 0.0
    %93 = vmatpush1.msra.mxu0 0.0
    %94 = vmatprep.subr.mxu0 0.0
    %95 = vmatpush1.msra.mxu0 0.0
    %96 = vmatprep.subr.mxu0 0.0
    %97 = vmatpush1.msra.mxu0 0.0
    %98 = vmatprep.subr.mxu0 0.0
    %99 = vmatpush1.msra.mxu0 0.0
    %100 = vmatprep.subr.mxu0 0.0
    %101 = vmatpush1.msra.mxu0 0.0
    %102 = vmatprep.subr.mxu0 0.0
    %103 = vmatpush1.msra.mxu0 0.0
    %104 = vmatprep.subr.mxu0 0.0
    %105 = vmatpush1.msra.mxu0 0.0
    %106 = vmatprep.subr.mxu0 0.0
    %107 = vmatpush1.msra.mxu0 0.0
    %108 = vmatprep.subr.mxu0 0.0
    %109 = vmatpush1.msra.mxu0 0.0
    %110 = vmatprep.subr.mxu0 0.0
    %111 = vmatpush1.msra.mxu0 0.0
    %112 = vmatprep.subr.mxu0 0.0
    %113 = vmatpush1.msra.mxu0 0.0
    %114 = vmatprep.subr.mxu0 0.0
    %115 = vmatpush1.msra.mxu0 %v78
    %116 = vmatprep.subr.mxu0 0.0
    %117 = vmatpush1.msra.mxu0 %v77
    %118 = vmatprep.subr.mxu0 0.0
    %119 = vmatpush1.msra.mxu0 %v76
    %120 = vmatprep.subr.mxu0 0.0
    %121 = vmatpush1.msra.mxu0 %v75
    %122 = vmatprep.subr.mxu0 0.0
    %123 = vmatpush2.msra.mxu0 0.0
    %124 = vmatprep.subr.mxu0 0.0
    %125 = vmatpush2.msra.mxu0 0.0
    %126 = vmatprep.subr.mxu0 0.0
    %127 = vmatpush2.msra.mxu0 0.0
    %128 = vmatprep.subr.mxu0 0.0
    %129 = vmatpush2.msra.mxu0 0.0
    %130 = vmatprep.subr.mxu0 0.0
    %131 = vmatpush2.msra.mxu0 0.0
    %132 = vmatprep.subr.mxu0 0.0
    %133 = vmatpush2.msra.mxu0 0.0
    %134 = vmatprep.subr.mxu0 0.0
    %135 = vmatpush2.msra.mxu0 0.0
    %136 = vmatprep.subr.mxu0 0.0
    %137 = vmatpush2.msra.mxu0 0.0
    %138 = vmatprep.subr.mxu0 0.0
    %139 = vmatpush2.msra.mxu0 0.0
    %140 = vmatprep.subr.mxu0 0.0
    %141 = vmatpush2.msra.mxu0 0.0
    %142 = vmatprep.subr.mxu0 0.0
    %143 = vmatpush2.msra.mxu0 0.0
    %144 = vmatprep.subr.mxu0 0.0
    %145 = vmatpush2.msra.mxu0 0.0
    %146 = vmatprep.subr.mxu0 0.0
    %147 = vmatpush2.msra.mxu0 0.0
    %148 = vmatprep.subr.mxu0 0.0
    %149 = vmatpush2.msra.mxu0 0.0
    %150 = vmatprep.subr.mxu0 0.0
    %151 = vmatpush2.msra.mxu0 0.0
    %152 = vmatprep.subr.mxu0 0.0
    %153 = vmatpush2.msra.mxu0 0.0
    %154 = vmatprep.mubr.f32.mxu0 0.0
    %155 = vmatmul.mubr.f32.gmra.mxu0 %v88
    %v156 = vpop.f32.mrf.mxu0
    %v157 = vadd.f32 %v84, %v156
    %v158 = vpop.f32.mrf.mxu0
    %159 = vdwg.mxu0
    %v160 = vmul.f32 %v157, 0.5
    %v161 = vmul.f32 %v157, 0.044715
    %v162 = vmul.f32 %v161, %v157
    %v163 = vmul.f32 %v162, %v157
    %v164 = vadd.f32 %v157, %v163
    %v165 = vmul.f32 %v164, 0.7978846
    %v166 = vtanh.pop %v165
    %v167 = vadd.f32 %v166, 1.0
    %v168 = vmul.f32 %v160, %v167
    %v169 = vld [vmem:[%s71] sm:$0xff]
    %v170 = vld [vmem:[%s71 + $0x8] sm:$0xff]
    %v171 = vld [vmem:[%s71 + $0x10] sm:$0xff]
    %v172 = vld [vmem:[%s71 + $0x18] sm:$0xff]
    %v173 = vld [vmem:[%s71 + $0x20] sm:$0xff]
    %v174 = vld [vmem:[%s71 + $0x28] sm:$0xff]
    %v175 = vld [vmem:[%s71 + $0x30] sm:$0xff]
    %v176 = vld [vmem:[%s71 + $0x38] sm:$0xff]
    %v177 = vld [vmem:[%s71 + $0x40] sm:$0xff]
    %v178 = vld [vmem:[%s71 + $0x48] sm:$0xff]
    %v179 = vld [vmem:[%s71 + $0x50] sm:$0xff]
    %v180 = vld [vmem:[%s71 + $0x58] sm:$0xff]
    %v181 = vld [vmem:[%s71 + $0x60] sm:$0xff]
    %v182 = vld [vmem:[%s71 + $0x68] sm:$0xff]
    %v183 = vld [vmem:[%s71 + $0x70] sm:$0xff]
    %v184 = vld [vmem:[%s71 + $0x78] sm:$0xff]
    %v185 = vld [vmem:[%s4] sm:$0x1]
    %v187 = vlaneseq
    %v188 = vshrl.u32 %v187, 7
    %v189 = vsub.s32 0, %v188
    %v190 = vrot.slane %v185, %v189
    %192 = vmatprep.subr.mxu0 0.0
    %193 = vmatpush1.msra.mxu0 %v184
    %194 = vmatprep.subr.mxu0 0.0
    %195 = vmatpush1.msra.mxu0 %v183
    %196 = vmatprep.subr.mxu0 0.0
    %197 = vmatpush1.msra.mxu0 %v182
    %198 = vmatprep.subr.mxu0 0.0
    %199 = vmatpush1.msra.mxu0 %v181
    %200 = vmatprep.subr.mxu0 0.0
    %201 = vmatpush1.msra.mxu0 %v180
    %202 = vmatprep.subr.mxu0 0.0
    %203 = vmatpush1.msra.mxu0 %v179
    %204 = vmatprep.subr.mxu0 0.0
    %205 = vmatpush1.msra.mxu0 %v178
    %206 = vmatprep.subr.mxu0 0.0
    %207 = vmatpush1.msra.mxu0 %v177
    %208 = vmatprep.subr.mxu0 0.0
    %209 = vmatpush1.msra.mxu0 %v176
    %210 = vmatprep.subr.mxu0 0.0
    %211 = vmatpush1.msra.mxu0 %v175
    %212 = vmatprep.subr.mxu0 0.0
    %213 = vmatpush1.msra.mxu0 %v174
    %214 = vmatprep.subr.mxu0 0.0
    %215 = vmatpush1.msra.mxu0 %v173
    %216 = vmatprep.subr.mxu0 0.0
    %217 = vmatpush1.msra.mxu0 %v172
    %218 = vmatprep.subr.mxu0 0.0
    %219 = vmatpush1.msra.mxu0 %v171
    %220 = vmatprep.subr.mxu0 0.0
    %221 = vmatpush1.msra.mxu0 %v170
    %222 = vmatprep.subr.mxu0 0.0
    %223 = vmatpush1.msra.mxu0 %v169
    %224 = vmatprep.subr.mxu0 0.0
    %225 = vmatpush2.msra.mxu0 0.0
    %226 = vmatprep.subr.mxu0 0.0
    %227 = vmatpush2.msra.mxu0 0.0
    %228 = vmatprep.subr.mxu0 0.0
    %229 = vmatpush2.msra.mxu0 0.0
    %230 = vmatprep.subr.mxu0 0.0
    %231 = vmatpush2.msra.mxu0 0.0
    %232 = vmatprep.subr.mxu0 0.0
    %233 = vmatpush2.msra.mxu0 0.0
    %234 = vmatprep.subr.mxu0 0.0
    %235 = vmatpush2.msra.mxu0 0.0
    %236 = vmatprep.subr.mxu0 0.0
    %237 = vmatpush2.msra.mxu0 0.0
    %238 = vmatprep.subr.mxu0 0.0
    %239 = vmatpush2.msra.mxu0 0.0
    %240 = vmatprep.subr.mxu0 0.0
    %241 = vmatpush2.msra.mxu0 0.0
    %242 = vmatprep.subr.mxu0 0.0
    %243 = vmatpush2.msra.mxu0 0.0
    %244 = vmatprep.subr.mxu0 0.0
    %245 = vmatpush2.msra.mxu0 0.0
    %246 = vmatprep.subr.mxu0 0.0
    %247 = vmatpush2.msra.mxu0 0.0
    %248 = vmatprep.subr.mxu0 0.0
    %249 = vmatpush2.msra.mxu0 0.0
    %250 = vmatprep.subr.mxu0 0.0
    %251 = vmatpush2.msra.mxu0 0.0
    %252 = vmatprep.subr.mxu0 0.0
    %253 = vmatpush2.msra.mxu0 0.0
    %254 = vmatprep.subr.mxu0 0.0
    %255 = vmatpush2.msra.mxu0 0.0
    %256 = vmatprep.mubr.f32.mxu0 0.0
    %257 = vmatmul.mubr.f32.gmra.mxu0 %v168
    %v258 = vpop.f32.mrf.mxu0
    %v259 = vadd.f32 %v190, %v258
    %v260 = vpop.f32.mrf.mxu0
    %261 = vdwg.mxu0
    %262 = vst.msk [vmem:[#allocation2] sm:$0xff] %vm86, %v259
    // Predicated region
    $region22: #{gpt_bigcode_mlp.1} parent=1 // pred_check
      _
    $region23: #{gpt_bigcode_mlp.1} parent=1 // pred_check_branch
      %264 = sbr.rel (0) target = $region25
    $region24: #{gpt_bigcode_mlp.1} parent=1 // pred_region
      %s266 = ssub.s32 128, 128
      %267 = vsyncadd [#allocation3], %s266
      %s269 = sshll.u32 [#allocation2], 4
      %s270 = int_to_ptr.vmem [resolvable:$true] %s269
      %272 = dma.vmem_to_hbm [thread:$0]  %s270, 128, %s5, [#allocation3]
    $region25: #{gpt_bigcode_mlp.1} parent=1 // pred_fallthru
      _
    // Predicated region
    $region26: #{gpt_bigcode_mlp.1} parent=1 // pred_check
      _
    $region27: #{gpt_bigcode_mlp.1} parent=1 // pred_check_branch
      %274 = sbr.rel (0) target = $region29
    $region28: #{gpt_bigcode_mlp.1} parent=1 // pred_region
      %275 = dma.done [#allocation3], 128
    $region29: #{gpt_bigcode_mlp.1} parent=1 // pred_fallthru
      _
    %276 = vsyncpa [#allocation3], 1

</llo_original>
